<compile_context>
chip_gen: v7x
topology: tpu7x:2x2x1
jax: 0.10.0
libtpu: 0.0.40
codegen_flags: <defaults>
</compile_context>

<pallas_src>
import jax
import jax.numpy as jnp
from jax.experimental import pallas as pl
from jax.experimental.pallas import tpu as pltpu


# --------------------------------------------------------------------------
# Pallas kernel: batch-major scatter-as-matmul.
#   O_block (TB, coords^2) = M_block (TB, k^2) @ P (k^2, coords^2)
# P is an exact 0/1 one-hot scatter matrix (one nonzero per row), so the
# matmul is bit-exact even for bf16 inputs; the MXU performs the lane-axis
# scatter for free while the kernel stays HBM-bound.
# --------------------------------------------------------------------------
def _supermatrix_kernel(m_ref, p_ref, o_ref):
    o_ref[...] = jnp.dot(
        m_ref[...], p_ref[...], preferred_element_type=jnp.float32
    ).astype(o_ref.dtype)


def _build_scatter_matrix(comps, coords, dtype=jnp.float32):
    """P with P[i*k + j, comps[i]*coords + comps[j]] = 1, shape (k^2, coords^2)."""
    comps = jnp.asarray(comps, jnp.int32)
    k = int(comps.shape[0])
    cols = (comps[:, None] * coords + comps[None, :]).reshape(-1)      # (k*k,)
    rows = jnp.arange(k * k, dtype=jnp.int32)
    return jnp.zeros((k * k, coords * coords), dtype).at[rows, cols].set(1)


_MAX_TB = 512                 # batch rows per tile (~85% of HBM roofline measured)
_VMEM_BUDGET = 8 << 20        # conservative vs. v5e's 16 MiB default scoped VMEM
_PALLAS_MIN_ELEMS = 1 << 16   # below this output size, fused XLA scatter wins


def _pick_batch_tile(B, kk, cc, itemsize):
    # Double-buffered input + output tiles plus the (double-buffered) constant P
    # must fit comfortably in scoped VMEM on every generation (v5e 16 MiB,
    # v6e/v7x 32 MiB defaults).
    # TODO(synk): for very large coords, tile the coords^2 axis with a second
    # grid dimension instead of shrinking TB.
    p_bytes = 2 * kk * cc * itemsize
    row_bytes = 2 * (kk + cc) * itemsize
    tb = (_VMEM_BUDGET - p_bytes) // row_bytes
    tb = int(max(8, min(_MAX_TB, (tb // 8) * 8)))
    return int(B) if B <= tb else tb


def supermatrix(M, comps_idx, P, coords):
    """M: (B, k, k) -> (B, coords, coords), M scattered into rows/cols `comps`."""
    B, k, _ = M.shape
    kk, cc = k * k, coords * coords
    dtype = M.dtype

    # Tiny workloads: kernel launch + pipelining overhead dominates; let XLA
    # fuse the scatter directly.
    if B * cc < _PALLAS_MIN_ELEMS:
        return (
            jnp.zeros((B, coords, coords), dtype)
            .at[:, comps_idx[:, None], comps_idx[None, :]]
            .set(M)
        )

    # Batch-major: no transposes, no padding, contiguous per-tile DMAs; the
    # reshape back to (B, coords, coords) on return is free.
    Mf = M.reshape(B, kk)
    TB = _pick_batch_tile(B, kk, cc, jnp.dtype(dtype).itemsize)

    out = pl.pallas_call(
        _supermatrix_kernel,
        out_shape=jax.ShapeDtypeStruct((B, cc), dtype),
        grid_spec=pltpu.PrefetchScalarGridSpec(
            num_scalar_prefetch=0,
            grid=(pl.cdiv(B, TB),),          # ragged last block is masked by Pallas
            in_specs=[
                pl.BlockSpec((TB, kk), lambda b: (b, 0)),
                pl.BlockSpec((kk, cc), lambda b: (0, 0)),   # grid-invariant P
            ],
            out_specs=pl.BlockSpec((TB, cc), lambda b: (b, 0)),
        ),
        compiler_params=pltpu.CompilerParams(
            dimension_semantics=("parallel",)),   # shard tiles across v7x's 2 TCs
    )(Mf, P.astype(dtype))

    return out.reshape(B, coords, coords)


# --------------------------------------------------------------------------
# JAX port of SmoothableField's concrete machinery.
# --------------------------------------------------------------------------
class SmoothableFieldPallas:
    def __init__(self, coords, channels, anisotropic, smoothable_comps):
        self.coords = int(coords)
        self.channels = int(channels)
        self.anisotropic = bool(anisotropic)
        self.smoothable_comps = (
            set(map(int, smoothable_comps))
            if smoothable_comps is not None
            else set(range(self.coords))
        )
        if len(self.smoothable_comps) == 0:
            raise ValueError("Smoothable field without smoothable components.")
        if any(c < 0 or c >= self.coords for c in self.smoothable_comps):
            raise ValueError(
                "Some smoothable components are not even part of the input coordinates."
            )
        if not anisotropic and len(self.smoothable_comps) < self.coords:
            raise ValueError(
                "Anisotropic smoothable field can't restrict smoothable components."
            )
        self._comps = sorted(self.smoothable_comps)
        self._k = len(self._comps)
        self._comps_arr = jnp.asarray(self._comps, jnp.int32)
        # One-hot scatter matrix P (folds the E / E^T of the torch version).
        self._P = _build_scatter_matrix(self._comps, self.coords)
        # 0/1 diagonal mask for the scalar / per-batch-scalar fast path.
        self._diag_mask = (
            jnp.zeros((self.coords, self.coords), jnp.float32)
            .at[self._comps_arr, self._comps_arr]
            .set(1.0)
        )

    # TODO(synk): forward(X, scales) is abstract in SmoothableField — no concrete
    # semantics exist to port; subclasses consume prepare_scales()/supermatrix().

    def prepare_scales(self, X, scales):
        """Port of SmoothableField._prepare_scales."""
        if scales is None:
            return None, False, False
        if X.ndim < 2:
            raise ValueError("X must carry a leading batch dimension: (batch, coords).")
        scales = jnp.asarray(scales, dtype=X.dtype)
        # TODO(synk): torch's `if not scales.any(): return (None, False, False)` is a
        # data-dependent early exit to a different pytree shape; not traceable here.
        batch_shape = X.shape[:1]
        k = self._k
        aniso_shape = (k, k)

        if scales.shape == () or scales.shape == batch_shape:
            if k == self.coords:
                return scales, False, scales.ndim == 1
            # Scalar / per-batch scalar: broadcast onto the precomputed 0/1
            # diagonal mask (memory-bound; skips diag_embed + the MXU entirely).
            per_batch = scales.ndim == 1
            O = scales[..., None, None] * self._diag_mask.astype(X.dtype)
            return O, True, per_batch

        if scales.shape == aniso_shape or scales.shape == batch_shape + aniso_shape:
            if not self.anisotropic:
                raise ValueError("This field does not support anisotropic smoothing.")
            per_batch = scales.ndim == 3
            M = scales if per_batch else scales[None]
            O = supermatrix(M.astype(X.dtype), self._comps_arr, self._P, self.coords)
            if not per_batch:
                O = O[0]
            return O, True, per_batch

        raise ValueError(
            f"Scales shape {scales.shape} clashes with field type or X shape {X.shape}."
        )


# --------------------------------------------------------------------------
# Self-test.
# --------------------------------------------------------------------------
if __name__ == "__main__":
    key = jax.random.PRNGKey(0)
    batch, coords, channels = 2, 8, 4
    comps = [1, 3, 4, 6]                       # k = 4 smoothable components
    k = len(comps)
    field = SmoothableFieldPallas(coords, channels, anisotropic=True,
                                  smoothable_comps=comps)

    kx, ks, km, k4, k5 = jax.random.split(key, 5)
    idx = jnp.array(comps)
    X = jax.random.normal(kx, (batch, coords), jnp.float32)

    # Case 1: per-batch scalar scales -> diagonal fast path (no kernel).
    s_vec = jax.random.uniform(ks, (batch,), jnp.float32) + 0.1
    O1, a1, pb1 = field.prepare_scales(X, s_vec)
    ref1 = jnp.zeros((batch, coords, coords), jnp.float32).at[:, idx, idx].set(
        s_vec[:, None])

    # Case 2: small (batch, k, k) scales -> small-workload XLA bypass.
    A = jax.random.normal(km, (batch, k, k), jnp.float32)
    M2 = A @ jnp.swapaxes(A, -1, -2)
    O2, a2, pb2 = field.prepare_scales(X, M2)
    ref2 = jnp.zeros((batch, coords, coords), jnp.float32).at[
        :, idx[:, None], idx[None, :]].set(M2)

    # Case 3: single (k, k) scales (no batch) -> bypass, squeezed output.
    O3, a3, pb3 = field.prepare_scales(X, M2[0])
    ref3 = ref2[0]

    # Case 4: B=1024 -> Pallas kernel, grid of 2 x 512-row batch tiles.
    B4 = 1024
    A4 = jax.random.normal(k4, (B4, k, k), jnp.float32)
    M4 = A4 @ jnp.swapaxes(A4, -1, -2)
    X4 = jnp.zeros((B4, coords), jnp.float32)
    O4, a4, pb4 = field.prepare_scales(X4, M4)
    ref4 = jnp.zeros((B4, coords, coords), jnp.float32).at[
        :, idx[:, None], idx[None, :]].set(M4)

    # Case 5: B=1037 -> Pallas kernel with a ragged (masked) last tile.
    B5 = 1037
    A5 = jax.random.normal(k5, (B5, k, k), jnp.float32)
    M5 = A5 @ jnp.swapaxes(A5, -1, -2)
    X5 = jnp.zeros((B5, coords), jnp.float32)
    O5, a5, pb5 = field.prepare_scales(X5, M5)
    ref5 = jnp.zeros((B5, coords, coords), jnp.float32).at[
        :, idx[:, None], idx[None, :]].set(M5)

    for O in (O1, O2, O3, O4, O5):
        jax.block_until_ready(O)

    assert a1 and pb1
    assert a2 and pb2
    assert a3 and not pb3
    assert a4 and pb4
    assert a5 and pb5
    assert O1.shape == (batch, coords, coords)
    assert O2.shape == (batch, coords, coords)
    assert O3.shape == (coords, coords)
    assert O4.shape == (B4, coords, coords)
    assert O5.shape == (B5, coords, coords)
    assert jnp.allclose(O1, ref1, atol=1e-5), "scalar-scales supermatrix mismatch"
    assert jnp.allclose(O2, ref2, atol=1e-5), "small-batch supermatrix mismatch"
    assert jnp.allclose(O3, ref3, atol=1e-5), "unbatched supermatrix mismatch"
    assert jnp.allclose(O4, ref4, atol=1e-5), "pallas supermatrix mismatch"
    assert jnp.allclose(O5, ref5, atol=1e-5), "ragged-grid supermatrix mismatch"

    print("KERNEL_OK")
</pallas_src>

<mosaic_0001>
module attributes {stable_mosaic.version = 11 : i64} {
  func.func @_supermatrix_kernel(%arg0: i32, %arg1: memref<512x16xf32, #tpu.memory_space<vmem>>, %arg2: memref<16x64xf32, #tpu.memory_space<vmem>>, %arg3: memref<512x64xf32, #tpu.memory_space<vmem>>) attributes {dimension_semantics = [#tpu.dimension_semantics<parallel>], iteration_bounds = array<i64: 2>, scalar_prefetch = 0 : i64, scratch_operands = 0 : i64, tpu.core_type = #tpu.core_type<tc>, window_params = [{transform_indices = @transform_0, window_bounds = array<i64: 512, 16>}, {pipeline_mode = #tpu.pipeline_mode<synchronous>, transform_indices = @transform_1, window_bounds = array<i64: 16, 64>}, {transform_indices = @transform_2, window_bounds = array<i64: 512, 64>}]} {
    %c0 = arith.constant 0 : index
    %c0_0 = arith.constant 0 : index
    %0 = vector.load %arg1[%c0, %c0_0] : memref<512x16xf32, #tpu.memory_space<vmem>>, vector<512x16xf32>
    %c0_1 = arith.constant 0 : index
    %c0_2 = arith.constant 0 : index
    %1 = vector.load %arg2[%c0_1, %c0_2] : memref<16x64xf32, #tpu.memory_space<vmem>>, vector<16x64xf32>
    %cst = arith.constant dense<0.000000e+00> : vector<512x64xf32>
    %2 = tpu.matmul %0, %1, %cst {dimension_numbers = #tpu.dot_dimension_numbers<[1], [0], [0], [1], [0, 0, 1, 1], [], []>} : vector<512x16xf32>, vector<16x64xf32>, vector<512x64xf32> -> vector<512x64xf32>
    %c0_3 = arith.constant 0 : index
    %c0_4 = arith.constant 0 : index
    %3 = vector.load %arg3[%c0_3, %c0_4] : memref<512x64xf32, #tpu.memory_space<vmem>>, vector<512x64xf32>
    tpu.vector_store %arg3[%c0_3, %c0_4], %2 {strides = array<i32>} : memref<512x64xf32, #tpu.memory_space<vmem>>, vector<512x64xf32>,
    return
  }
  func.func @transform_0(%arg0: i32) -> (i32, i32) {
    %c0_i32 = arith.constant 0 : i32
    %c0_i32_0 = arith.constant 0 : i32
    return %arg0, %c0_i32 : i32, i32
  }
  func.func @transform_1(%arg0: i32) -> (i32, i32) {
    %c0_i32 = arith.constant 0 : i32
    %c0_i32_0 = arith.constant 0 : i32
    %c0_i32_1 = arith.constant 0 : i32
    return %c0_i32, %c0_i32_0 : i32, i32
  }
  func.func @transform_2(%arg0: i32) -> (i32, i32) {
    %c0_i32 = arith.constant 0 : i32
    %c0_i32_0 = arith.constant 0 : i32
    return %arg0, %c0_i32 : i32, i32
  }
}

</mosaic_0001>

<llo_original>
// kernel: tpu_custom_call.1
$region0: #{tpu_custom_call.1}
  #allocation0 [shape = 'u32[]', space=smem, size = 0x4, offset = 0x4, fixed_abs, tag = 'smem constant byte address 0x4 - core index']
  #allocation1 [shape = 'u32[144,128]{1,0:T(1,128)}', space=vmem, size = 0x12000, scoped, tag = 'internal scratch']
  %s0 = inlined_call_operand.vmem [shape: f32[1024,16], index: 0, kind: input, shape index: {}]
  %s1 = inlined_call_operand.vmem [shape: f32[16,64], index: 1, kind: input, shape index: {}]
  %s2 = inlined_call_operand.vmem [shape: f32[1024,64], index: 2, kind: output, shape index: {}]
  %s3 = sld [smem:[#allocation0]]
  $region41: #{tpu_custom_call.1} parent=0
    _
  %s5 = ssub.s32 1, %s3
  %s6 = scalar_select 0, %s5, %s3
  loop: start=0, step=1, limit=4
  $region2: #{tpu_custom_call.1} parent=0 // loop_pre_header
    _
  $region3: #{tpu_custom_call.1} parent=0 // loop_header
    %s8 = sphi 0, %s12
    %p9 = scmp.ge.s32.totalorder %s8, 4
    %s18 = sphi 0, %s20
    %s21 = sphi 0, %s18
    %s22 = sphi 0, %s21
    %s38 = sphi 0, %s22
    %s42 = sphi 0, %s42
    %s44 = sphi 0, %s42
    %s45 = sphi 0, %s44
    %s59 = sphi 0, %s45
    %s65 = sphi 0, %s67
    %s68 = sphi 0, %s65
    %s69 = sphi 0, %s68
    %s85 = sphi 0, %s69
  $region4: #{tpu_custom_call.1} parent=0 // loop_header_branch
    %11 = sbr.rel (%p9) target = $region8
  $region5: #{tpu_custom_call.1} parent=0 // loop_body
    %s13 = ssub.s32 %s8, 1
    %s14 = ssub.s32 %s8, 2
    %s15 = sadd.s32 %s8, 1
    %s16 = ssub.s32 %s8, %s15
    %p17 = scmp.eq.s32.totalorder %s16, 0
    %s19 = sadd.s32 %s18, 1
    %s20 = scalar_select %p17, %s18, %s19
    %p23 = pneg %p17
    %p24 = scmp.eq.s32.totalorder %s8, 1
    %p25 = por %p23, %p24
    %p26 = scmp.ne.s32.totalorder %s18, %s21
    %p27 = scmp.eq.s32.totalorder %s8, 0
    %p28 = por %p26, %p27
    %p29 = scmp.ne.s32.totalorder %s18, %s21
    %p30 = scmp.eq.s32.totalorder %s13, 1
    %p31 = por %p29, %p30
    %p32 = scmp.ne.s32.totalorder %s21, %s22
    %p33 = scmp.eq.s32.totalorder %s13, 0
    %p34 = por %p32, %p33
    %p35 = scmp.ne.s32.totalorder %s21, %s22
    %p36 = scmp.eq.s32.totalorder %s14, 1
    %p37 = por %p35, %p36
    %p39 = scmp.ne.s32.totalorder %s22, %s38
    %p40 = scmp.eq.s32.totalorder %s14, 0
    %p41 = por %p39, %p40
    %s43 = sadd.s32 %s42, 1
    %p46 = scmp.eq.s32.totalorder %s8, 1
    %p47 = scmp.ne.s32.totalorder %s42, %s44
    %p48 = scmp.eq.s32.totalorder %s8, 0
    %p49 = por %p47, %p48
    %p50 = scmp.ne.s32.totalorder %s42, %s44
    %p51 = scmp.eq.s32.totalorder %s13, 1
    %p52 = por %p50, %p51
    %p53 = scmp.ne.s32.totalorder %s44, %s45
    %p54 = scmp.eq.s32.totalorder %s13, 0
    %p55 = por %p53, %p54
    %p56 = scmp.ne.s32.totalorder %s44, %s45
    %p57 = scmp.eq.s32.totalorder %s14, 1
    %p58 = por %p56, %p57
    %p60 = scmp.ne.s32.totalorder %s45, %s59
    %p61 = scmp.eq.s32.totalorder %s14, 0
    %p62 = por %p60, %p61
    %s63 = ssub.s32 %s8, %s15
    %p64 = scmp.eq.s32.totalorder %s63, 0
    %s66 = sadd.s32 %s65, 1
    %s67 = scalar_select %p64, %s65, %s66
    %p70 = pneg %p64
    %p71 = scmp.eq.s32.totalorder %s8, 1
    %p72 = por %p70, %p71
    %p73 = scmp.ne.s32.totalorder %s65, %s68
    %p74 = scmp.eq.s32.totalorder %s8, 0
    %p75 = por %p73, %p74
    %p76 = scmp.ne.s32.totalorder %s65, %s68
    %p77 = scmp.eq.s32.totalorder %s13, 1
    %p78 = por %p76, %p77
    %p79 = scmp.ne.s32.totalorder %s68, %s69
    %p80 = scmp.eq.s32.totalorder %s13, 0
    %p81 = por %p79, %p80
    %p82 = scmp.ne.s32.totalorder %s68, %s69
    %p83 = scmp.eq.s32.totalorder %s14, 1
    %p84 = por %p82, %p83
    %p86 = scmp.ne.s32.totalorder %s69, %s85
    %p87 = scmp.eq.s32.totalorder %s14, 0
    %p88 = por %p86, %p87
    %p89 = scmp.le.s32.totalorder 1, %s8
    %p90 = scmp.lt.s32.totalorder %s8, 3
    %p91 = pnand %p89, %p90
    %p92 = pneg %p91
    // Predicated region
    $region9: #{tpu_custom_call.1} parent=5 // pred_check
      _
    $region10: #{tpu_custom_call.1} parent=5 // pred_check_branch
      %94 = sbr.rel (%p91) target = $region12
    $region11: #{tpu_custom_call.1} parent=5 // pred_region
      %s95 = ssub.s32 %s8, 1
      // Predicated region
      $region13: #{tpu_custom_call.1} parent=11 // pred_check
        %p96 = pneg %p55
      $region14: #{tpu_custom_call.1} parent=11 // pred_check_branch
        %98 = sbr.rel (%p96) target = $region16
      $region15: #{tpu_custom_call.1} parent=11 // pred_region
        _
      $region16: #{tpu_custom_call.1} parent=11 // pred_fallthru
        _
    $region12: #{tpu_custom_call.1} parent=5 // pred_fallthru
      _
    %p99 = scmp.lt.s32.totalorder %s8, 2
    // Predicated region
    $region17: #{tpu_custom_call.1} parent=5 // pred_check
      %p100 = pneg %p99
    $region18: #{tpu_custom_call.1} parent=5 // pred_check_branch
      %102 = sbr.rel (%p100) target = $region20
    $region19: #{tpu_custom_call.1} parent=5 // pred_region
      // Predicated region
      $region21: #{tpu_custom_call.1} parent=19 // pred_check
        %p103 = pneg %p28
      $region22: #{tpu_custom_call.1} parent=19 // pred_check_branch
        %105 = sbr.rel (%p103) target = $region24
      $region23: #{tpu_custom_call.1} parent=19 // pred_region
        %s106 = smul.u32 64, %s8
        %p107 = scmp.lt.s32.totalorder %s106, 127
        %s108 = scalar_select %p107, %s106, 127
        %s109 = smul.addr %s108, 8
        %s110 = scalar_lea.vmem %s0, %s109
        %s111 = smul.u32 64, %s8
      $region24: #{tpu_custom_call.1} parent=19 // pred_fallthru
        _
    $region20: #{tpu_custom_call.1} parent=5 // pred_fallthru
      _
    %p112 = scmp.le.s32.totalorder 1, %s8
    %p113 = scmp.lt.s32.totalorder %s8, 3
    %p114 = pnand %p112, %p113
    %p115 = pneg %p114
    // Predicated region
    $region25: #{tpu_custom_call.1} parent=5 // pred_check
      _
    $region26: #{tpu_custom_call.1} parent=5 // pred_check_branch
      %117 = sbr.rel (%p114) target = $region28
    $region27: #{tpu_custom_call.1} parent=5 // pred_region
      %s118 = ssub.s32 %s8, 1
      %s119 = smul.u32 64, %s13
      %p120 = scmp.lt.s32.totalorder %s119, 127
      %s121 = scalar_select %p120, %s119, 127
      %s122 = smul.addr %s121, 8
      %s123 = scalar_lea.vmem %s0, %s122
      %p124 = pneg %p34
      %p125 = pneg %p31
      %p126 = pneg %p55
      %p127 = pneg %p52
      %p128 = pneg %p81
      %p129 = pneg %p78
      %s130 = smul.u32 64, %s13
      %p131 = scmp.lt.s32.totalorder %s130, 127
      %s132 = scalar_select %p131, %s130, 127
      %s133 = smul.addr %s132, 8
      %s134 = scalar_lea.vmem %s2, %s133
      %s135 = smul.u32 64, %s13
      %p136 = scmp.lt.s32.totalorder %s135, 127
      %s137 = scalar_select %p136, %s135, 127
      %s138 = smul.addr %s137, 8
      %s139 = scalar_lea.vmem %s0, %s138
      %s140 = smul.u32 64, %s13
      %s141 = smul.u32 64, %s13
      %p142 = scmp.lt.s32.totalorder %s141, 127
      %s143 = scalar_select %p142, %s141, 127
      %s144 = smul.addr %s143, 8
      %s145 = scalar_lea.vmem %s2, %s144
      %s146 = smul.u32 64, %s13
      %v147 = vld [vmem:[%s139] sm:$0xff]
      %v148 = vld [vmem:[%s139 + $0x8] sm:$0xff]
      %v149 = vld [vmem:[%s139 + $0x10] sm:$0xff]
      %v150 = vld [vmem:[%s139 + $0x18] sm:$0xff]
      %v151 = vld [vmem:[%s139 + $0x20] sm:$0xff]
      %v152 = vld [vmem:[%s139 + $0x28] sm:$0xff]
      %v153 = vld [vmem:[%s139 + $0x30] sm:$0xff]
      %v154 = vld [vmem:[%s139 + $0x38] sm:$0xff]
      %v155 = vld [vmem:[%s139 + $0x40] sm:$0xff]
      %v156 = vld [vmem:[%s139 + $0x48] sm:$0xff]
      %v157 = vld [vmem:[%s139 + $0x50] sm:$0xff]
      %v158 = vld [vmem:[%s139 + $0x58] sm:$0xff]
      %v159 = vld [vmem:[%s139 + $0x60] sm:$0xff]
      %v160 = vld [vmem:[%s139 + $0x68] sm:$0xff]
      %v161 = vld [vmem:[%s139 + $0x70] sm:$0xff]
      %v162 = vld [vmem:[%s139 + $0x78] sm:$0xff]
      %v163 = vld [vmem:[%s139 + $0x80] sm:$0xff]
      %v164 = vld [vmem:[%s139 + $0x88] sm:$0xff]
      %v165 = vld [vmem:[%s139 + $0x90] sm:$0xff]
      %v166 = vld [vmem:[%s139 + $0x98] sm:$0xff]
      %v167 = vld [vmem:[%s139 + $0xa0] sm:$0xff]
      %v168 = vld [vmem:[%s139 + $0xa8] sm:$0xff]
      %v169 = vld [vmem:[%s139 + $0xb0] sm:$0xff]
      %v170 = vld [vmem:[%s139 + $0xb8] sm:$0xff]
      %v171 = vld [vmem:[%s139 + $0xc0] sm:$0xff]
      %v172 = vld [vmem:[%s139 + $0xc8] sm:$0xff]
      %v173 = vld [vmem:[%s139 + $0xd0] sm:$0xff]
      %v174 = vld [vmem:[%s139 + $0xd8] sm:$0xff]
      %v175 = vld [vmem:[%s139 + $0xe0] sm:$0xff]
      %v176 = vld [vmem:[%s139 + $0xe8] sm:$0xff]
      %v177 = vld [vmem:[%s139 + $0xf0] sm:$0xff]
      %v178 = vld [vmem:[%s139 + $0xf8] sm:$0xff]
      %v179 = vld [vmem:[%s139 + $0x100] sm:$0xff]
      %v180 = vld [vmem:[%s139 + $0x108] sm:$0xff]
      %v181 = vld [vmem:[%s139 + $0x110] sm:$0xff]
      %v182 = vld [vmem:[%s139 + $0x118] sm:$0xff]
      %v183 = vld [vmem:[%s139 + $0x120] sm:$0xff]
      %v184 = vld [vmem:[%s139 + $0x128] sm:$0xff]
      %v185 = vld [vmem:[%s139 + $0x130] sm:$0xff]
      %v186 = vld [vmem:[%s139 + $0x138] sm:$0xff]
      %v187 = vld [vmem:[%s139 + $0x140] sm:$0xff]
      %v188 = vld [vmem:[%s139 + $0x148] sm:$0xff]
      %v189 = vld [vmem:[%s139 + $0x150] sm:$0xff]
      %v190 = vld [vmem:[%s139 + $0x158] sm:$0xff]
      %v191 = vld [vmem:[%s139 + $0x160] sm:$0xff]
      %v192 = vld [vmem:[%s139 + $0x168] sm:$0xff]
      %v193 = vld [vmem:[%s139 + $0x170] sm:$0xff]
      %v194 = vld [vmem:[%s139 + $0x178] sm:$0xff]
      %v195 = vld [vmem:[%s139 + $0x180] sm:$0xff]
      %v196 = vld [vmem:[%s139 + $0x188] sm:$0xff]
      %v197 = vld [vmem:[%s139 + $0x190] sm:$0xff]
      %v198 = vld [vmem:[%s139 + $0x198] sm:$0xff]
      %v199 = vld [vmem:[%s139 + $0x1a0] sm:$0xff]
      %v200 = vld [vmem:[%s139 + $0x1a8] sm:$0xff]
      %v201 = vld [vmem:[%s139 + $0x1b0] sm:$0xff]
      %v202 = vld [vmem:[%s139 + $0x1b8] sm:$0xff]
      %v203 = vld [vmem:[%s139 + $0x1c0] sm:$0xff]
      %v204 = vld [vmem:[%s139 + $0x1c8] sm:$0xff]
      %v205 = vld [vmem:[%s139 + $0x1d0] sm:$0xff]
      %v206 = vld [vmem:[%s139 + $0x1d8] sm:$0xff]
      %v207 = vld [vmem:[%s139 + $0x1e0] sm:$0xff]
      %v208 = vld [vmem:[%s139 + $0x1e8] sm:$0xff]
      %v209 = vld [vmem:[%s139 + $0x1f0] sm:$0xff]
      %v210 = vld [vmem:[%s139 + $0x1f8] sm:$0xff]
      %v211 = vld [vmem:[%s1] sm:$0xff]
      %v212 = vld [vmem:[%s1 + $0x8] sm:$0xff]
      %vm213 = vcmask 130048
      %v215 = vsel %vm213, %v147, 0
      %v218 = vsel %vm213, %v148, 0
      %v221 = vsel %vm213, %v149, 0
      %v224 = vsel %vm213, %v150, 0
      %v227 = vsel %vm213, %v151, 0
      %v230 = vsel %vm213, %v152, 0
      %v233 = vsel %vm213, %v153, 0
      %v236 = vsel %vm213, %v154, 0
      %v239 = vsel %vm213, %v155, 0
      %v242 = vsel %vm213, %v156, 0
      %v245 = vsel %vm213, %v157, 0
      %v248 = vsel %vm213, %v158, 0
      %v251 = vsel %vm213, %v159, 0
      %v254 = vsel %vm213, %v160, 0
      %v257 = vsel %vm213, %v161, 0
      %v260 = vsel %vm213, %v162, 0
      %v263 = vsel %vm213, %v163, 0
      %v266 = vsel %vm213, %v164, 0
      %v269 = vsel %vm213, %v165, 0
      %v272 = vsel %vm213, %v166, 0
      %v275 = vsel %vm213, %v167, 0
      %v278 = vsel %vm213, %v168, 0
      %v281 = vsel %vm213, %v169, 0
      %v284 = vsel %vm213, %v170, 0
      %v287 = vsel %vm213, %v171, 0
      %v290 = vsel %vm213, %v172, 0
      %v293 = vsel %vm213, %v173, 0
      %v296 = vsel %vm213, %v174, 0
      %v299 = vsel %vm213, %v175, 0
      %v302 = vsel %vm213, %v176, 0
      %v305 = vsel %vm213, %v177, 0
      %v308 = vsel %vm213, %v178, 0
      %v311 = vsel %vm213, %v179, 0
      %v314 = vsel %vm213, %v180, 0
      %v317 = vsel %vm213, %v181, 0
      %v320 = vsel %vm213, %v182, 0
      %v323 = vsel %vm213, %v183, 0
      %v326 = vsel %vm213, %v184, 0
      %v329 = vsel %vm213, %v185, 0
      %v332 = vsel %vm213, %v186, 0
      %v335 = vsel %vm213, %v187, 0
      %v338 = vsel %vm213, %v188, 0
      %v341 = vsel %vm213, %v189, 0
      %v344 = vsel %vm213, %v190, 0
      %v347 = vsel %vm213, %v191, 0
      %v350 = vsel %vm213, %v192, 0
      %v353 = vsel %vm213, %v193, 0
      %v356 = vsel %vm213, %v194, 0
      %v359 = vsel %vm213, %v195, 0
      %v362 = vsel %vm213, %v196, 0
      %v365 = vsel %vm213, %v197, 0
      %v368 = vsel %vm213, %v198, 0
      %v371 = vsel %vm213, %v199, 0
      %v374 = vsel %vm213, %v200, 0
      %v377 = vsel %vm213, %v201, 0
      %v380 = vsel %vm213, %v202, 0
      %v383 = vsel %vm213, %v203, 0
      %v386 = vsel %vm213, %v204, 0
      %v389 = vsel %vm213, %v205, 0
      %v392 = vsel %vm213, %v206, 0
      %v395 = vsel %vm213, %v207, 0
      %v398 = vsel %vm213, %v208, 0
      %v401 = vsel %vm213, %v209, 0
      %v404 = vsel %vm213, %v210, 0
      %406 = vmatprep.subr.mxu0 0.0
      %407 = vmatpush1.msra.mxu0 %v211
      %408 = vmatprep.subr.mxu0 0.0
      %409 = vmatpush1.msra.mxu0 %v212
      %410 = vmatprep.subr.mxu0 0.0
      %411 = vmatpush1.msra.mxu0 0.0
      %412 = vmatprep.subr.mxu0 0.0
      %413 = vmatpush1.msra.mxu0 0.0
      %414 = vmatprep.subr.mxu0 0.0
      %415 = vmatpush1.msra.mxu0 0.0
      %416 = vmatprep.subr.mxu0 0.0
      %417 = vmatpush1.msra.mxu0 0.0
      %418 = vmatprep.subr.mxu0 0.0
      %419 = vmatpush1.msra.mxu0 0.0
      %420 = vmatprep.subr.mxu0 0.0
      %421 = vmatpush1.msra.mxu0 0.0
      %422 = vmatprep.subr.mxu0 0.0
      %423 = vmatpush1.msra.mxu0 0.0
      %424 = vmatprep.subr.mxu0 0.0
      %425 = vmatpush1.msra.mxu0 0.0
      %426 = vmatprep.subr.mxu0 0.0
      %427 = vmatpush1.msra.mxu0 0.0
      %428 = vmatprep.subr.mxu0 0.0
      %429 = vmatpush1.msra.mxu0 0.0
      %430 = vmatprep.subr.mxu0 0.0
      %431 = vmatpush1.msra.mxu0 0.0
      %432 = vmatprep.subr.mxu0 0.0
      %433 = vmatpush1.msra.mxu0 0.0
      %434 = vmatprep.subr.mxu0 0.0
      %435 = vmatpush1.msra.mxu0 0.0
      %436 = vmatprep.subr.mxu0 0.0
      %437 = vmatpush1.msra.mxu0 0.0
      %438 = vmatprep.subr.mxu0 0.0
      %439 = vmatpush1.msra.mxu0 0.0
      %440 = vmatprep.subr.mxu0 0.0
      %441 = vmatpush1.msra.mxu0 0.0
      %442 = vmatprep.subr.mxu0 0.0
      %443 = vmatpush1.msra.mxu0 0.0
      %444 = vmatprep.subr.mxu0 0.0
      %445 = vmatpush1.msra.mxu0 0.0
      %446 = vmatprep.subr.mxu0 0.0
      %447 = vmatpush1.msra.mxu0 0.0
      %448 = vmatprep.subr.mxu0 0.0
      %449 = vmatpush1.msra.mxu0 0.0
      %450 = vmatprep.subr.mxu0 0.0
      %451 = vmatpush1.msra.mxu0 0.0
      %452 = vmatprep.subr.mxu0 0.0
      %453 = vmatpush1.msra.mxu0 0.0
      %454 = vmatprep.subr.mxu0 0.0
      %455 = vmatpush1.msra.mxu0 0.0
      %456 = vmatprep.subr.mxu0 0.0
      %457 = vmatpush1.msra.mxu0 0.0
      %458 = vmatprep.subr.mxu0 0.0
      %459 = vmatpush1.msra.mxu0 0.0
      %460 = vmatprep.subr.mxu0 0.0
      %461 = vmatpush1.msra.mxu0 0.0
      %462 = vmatprep.subr.mxu0 0.0
      %463 = vmatpush1.msra.mxu0 0.0
      %464 = vmatprep.subr.mxu0 0.0
      %465 = vmatpush1.msra.mxu0 0.0
      %466 = vmatprep.subr.mxu0 0.0
      %467 = vmatpush1.msra.mxu0 0.0
      %468 = vmatprep.subr.mxu0 0.0
      %469 = vmatpush1.msra.mxu0 0.0
      %470 = vmatprep.mubr.f32.mxu0 0.0
      %471 = vmatmul.mubr.f32.gmra.mrb[0].mxu0 %v215
      %v472 = vpop.f32.mrb[0].mxu0
      %v473 = vadd.f32 0.0, %v472
      %v474 = vpop.f32.mrb[0].mxu0
      %475 = vmatprep.mubr.f32.mxu0 0.0
      %476 = vmatmul.mubr.f32.gmra.mrb[0].mxu0 %v218
      %v477 = vpop.f32.mrb[0].mxu0
      %v478 = vadd.f32 0.0, %v477
      %v479 = vpop.f32.mrb[0].mxu0
      %480 = vmatprep.mubr.f32.mxu0 0.0
      %481 = vmatmul.mubr.f32.gmra.mrb[0].mxu0 %v221
      %v482 = vpop.f32.mrb[0].mxu0
      %v483 = vadd.f32 0.0, %v482
      %v484 = vpop.f32.mrb[0].mxu0
      %485 = vmatprep.mubr.f32.mxu0 0.0
      %486 = vmatmul.mubr.f32.gmra.mrb[0].mxu0 %v224
      %v487 = vpop.f32.mrb[0].mxu0
      %v488 = vadd.f32 0.0, %v487
      %v489 = vpop.f32.mrb[0].mxu0
      %490 = vmatprep.mubr.f32.mxu0 0.0
      %491 = vmatmul.mubr.f32.gmra.mrb[0].mxu0 %v227
      %v492 = vpop.f32.mrb[0].mxu0
      %v493 = vadd.f32 0.0, %v492
      %v494 = vpop.f32.mrb[0].mxu0
      %495 = vmatprep.mubr.f32.mxu0 0.0
      %496 = vmatmul.mubr.f32.gmra.mrb[0].mxu0 %v230
      %v497 = vpop.f32.mrb[0].mxu0
      %v498 = vadd.f32 0.0, %v497
      %v499 = vpop.f32.mrb[0].mxu0
      %500 = vmatprep.mubr.f32.mxu0 0.0
      %501 = vmatmul.mubr.f32.gmra.mrb[0].mxu0 %v233
      %v502 = vpop.f32.mrb[0].mxu0
      %v503 = vadd.f32 0.0, %v502
      %v504 = vpop.f32.mrb[0].mxu0
      %505 = vmatprep.mubr.f32.mxu0 0.0
      %506 = vmatmul.mubr.f32.gmra.mrb[0].mxu0 %v236
      %v507 = vpop.f32.mrb[0].mxu0
      %v508 = vadd.f32 0.0, %v507
      %v509 = vpop.f32.mrb[0].mxu0
      %510 = vmatprep.mubr.f32.mxu0 0.0
      %511 = vmatmul.mubr.f32.gmra.mrb[0].mxu0 %v239
      %v512 = vpop.f32.mrb[0].mxu0
      %v513 = vadd.f32 0.0, %v512
      %v514 = vpop.f32.mrb[0].mxu0
      %515 = vmatprep.mubr.f32.mxu0 0.0
      %516 = vmatmul.mubr.f32.gmra.mrb[0].mxu0 %v242
      %v517 = vpop.f32.mrb[0].mxu0
      %v518 = vadd.f32 0.0, %v517
      %v519 = vpop.f32.mrb[0].mxu0
      %520 = vmatprep.mubr.f32.mxu0 0.0
      %521 = vmatmul.mubr.f32.gmra.mrb[0].mxu0 %v245
      %v522 = vpop.f32.mrb[0].mxu0
      %v523 = vadd.f32 0.0, %v522
      %v524 = vpop.f32.mrb[0].mxu0
      %525 = vmatprep.mubr.f32.mxu0 0.0
      %526 = vmatmul.mubr.f32.gmra.mrb[0].mxu0 %v248
      %v527 = vpop.f32.mrb[0].mxu0
      %v528 = vadd.f32 0.0, %v527
      %v529 = vpop.f32.mrb[0].mxu0
      %530 = vmatprep.mubr.f32.mxu0 0.0
      %531 = vmatmul.mubr.f32.gmra.mrb[0].mxu0 %v251
      %v532 = vpop.f32.mrb[0].mxu0
      %v533 = vadd.f32 0.0, %v532
      %v534 = vpop.f32.mrb[0].mxu0
      %535 = vmatprep.mubr.f32.mxu0 0.0
      %536 = vmatmul.mubr.f32.gmra.mrb[0].mxu0 %v254
      %v537 = vpop.f32.mrb[0].mxu0
      %v538 = vadd.f32 0.0, %v537
      %v539 = vpop.f32.mrb[0].mxu0
      %540 = vmatprep.mubr.f32.mxu0 0.0
      %541 = vmatmul.mubr.f32.gmra.mrb[0].mxu0 %v257
      %v542 = vpop.f32.mrb[0].mxu0
      %v543 = vadd.f32 0.0, %v542
      %v544 = vpop.f32.mrb[0].mxu0
      %545 = vmatprep.mubr.f32.mxu0 0.0
      %546 = vmatmul.mubr.f32.gmra.mrb[0].mxu0 %v260
      %v547 = vpop.f32.mrb[0].mxu0
      %v548 = vadd.f32 0.0, %v547
      %v549 = vpop.f32.mrb[0].mxu0
      %550 = vmatprep.mubr.f32.mxu0 0.0
      %551 = vmatmul.mubr.f32.gmra.mrb[0].mxu0 %v263
      %v552 = vpop.f32.mrb[0].mxu0
      %v553 = vadd.f32 0.0, %v552
      %v554 = vpop.f32.mrb[0].mxu0
      %555 = vmatprep.mubr.f32.mxu0 0.0
      %556 = vmatmul.mubr.f32.gmra.mrb[0].mxu0 %v266
      %v557 = vpop.f32.mrb[0].mxu0
      %v558 = vadd.f32 0.0, %v557
      %v559 = vpop.f32.mrb[0].mxu0
      %560 = vmatprep.mubr.f32.mxu0 0.0
      %561 = vmatmul.mubr.f32.gmra.mrb[0].mxu0 %v269
      %v562 = vpop.f32.mrb[0].mxu0
      %v563 = vadd.f32 0.0, %v562
      %v564 = vpop.f32.mrb[0].mxu0
      %565 = vmatprep.mubr.f32.mxu0 0.0
      %566 = vmatmul.mubr.f32.gmra.mrb[0].mxu0 %v272
      %v567 = vpop.f32.mrb[0].mxu0
      %v568 = vadd.f32 0.0, %v567
      %v569 = vpop.f32.mrb[0].mxu0
      %570 = vmatprep.mubr.f32.mxu0 0.0
      %571 = vmatmul.mubr.f32.gmra.mrb[0].mxu0 %v275
      %v572 = vpop.f32.mrb[0].mxu0
      %v573 = vadd.f32 0.0, %v572
      %v574 = vpop.f32.mrb[0].mxu0
      %575 = vmatprep.mubr.f32.mxu0 0.0
      %576 = vmatmul.mubr.f32.gmra.mrb[0].mxu0 %v278
      %v577 = vpop.f32.mrb[0].mxu0
      %v578 = vadd.f32 0.0, %v577
      %v579 = vpop.f32.mrb[0].mxu0
      %580 = vmatprep.mubr.f32.mxu0 0.0
      %581 = vmatmul.mubr.f32.gmra.mrb[0].mxu0 %v281
      %v582 = vpop.f32.mrb[0].mxu0
      %v583 = vadd.f32 0.0, %v582
      %v584 = vpop.f32.mrb[0].mxu0
      %585 = vmatprep.mubr.f32.mxu0 0.0
      %586 = vmatmul.mubr.f32.gmra.mrb[0].mxu0 %v284
      %v587 = vpop.f32.mrb[0].mxu0
      %v588 = vadd.f32 0.0, %v587
      %v589 = vpop.f32.mrb[0].mxu0
      %590 = vmatprep.mubr.f32.mxu0 0.0
      %591 = vmatmul.mubr.f32.gmra.mrb[0].mxu0 %v287
      %v592 = vpop.f32.mrb[0].mxu0
      %v593 = vadd.f32 0.0, %v592
      %v594 = vpop.f32.mrb[0].mxu0
      %595 = vmatprep.mubr.f32.mxu0 0.0
      %596 = vmatmul.mubr.f32.gmra.mrb[0].mxu0 %v290
      %v597 = vpop.f32.mrb[0].mxu0
      %v598 = vadd.f32 0.0, %v597
      %v599 = vpop.f32.mrb[0].mxu0
      %600 = vmatprep.mubr.f32.mxu0 0.0
      %601 = vmatmul.mubr.f32.gmra.mrb[0].mxu0 %v293
      %v602 = vpop.f32.mrb[0].mxu0
      %v603 = vadd.f32 0.0, %v602
      %v604 = vpop.f32.mrb[0].mxu0
      %605 = vmatprep.mubr.f32.mxu0 0.0
      %606 = vmatmul.mubr.f32.gmra.mrb[0].mxu0 %v296
      %v607 = vpop.f32.mrb[0].mxu0
      %v608 = vadd.f32 0.0, %v607
      %v609 = vpop.f32.mrb[0].mxu0
      %610 = vmatprep.mubr.f32.mxu0 0.0
      %611 = vmatmul.mubr.f32.gmra.mrb[0].mxu0 %v299
      %v612 = vpop.f32.mrb[0].mxu0
      %v613 = vadd.f32 0.0, %v612
      %v614 = vpop.f32.mrb[0].mxu0
      %615 = vmatprep.mubr.f32.mxu0 0.0
      %616 = vmatmul.mubr.f32.gmra.mrb[0].mxu0 %v302
      %v617 = vpop.f32.mrb[0].mxu0
      %v618 = vadd.f32 0.0, %v617
      %v619 = vpop.f32.mrb[0].mxu0
      %620 = vmatprep.mubr.f32.mxu0 0.0
      %621 = vmatmul.mubr.f32.gmra.mrb[0].mxu0 %v305
      %v622 = vpop.f32.mrb[0].mxu0
      %v623 = vadd.f32 0.0, %v622
      %v624 = vpop.f32.mrb[0].mxu0
      %625 = vmatprep.mubr.f32.mxu0 0.0
      %626 = vmatmul.mubr.f32.gmra.mrb[0].mxu0 %v308
      %v627 = vpop.f32.mrb[0].mxu0
      %v628 = vadd.f32 0.0, %v627
      %v629 = vpop.f32.mrb[0].mxu0
      %630 = vmatprep.mubr.f32.mxu0 0.0
      %631 = vmatmul.mubr.f32.gmra.mrb[0].mxu0 %v311
      %v632 = vpop.f32.mrb[0].mxu0
      %v633 = vadd.f32 0.0, %v632
      %v634 = vpop.f32.mrb[0].mxu0
      %635 = vmatprep.mubr.f32.mxu0 0.0
      %636 = vmatmul.mubr.f32.gmra.mrb[0].mxu0 %v314
      %v637 = vpop.f32.mrb[0].mxu0
      %v638 = vadd.f32 0.0, %v637
      %v639 = vpop.f32.mrb[0].mxu0
      %640 = vmatprep.mubr.f32.mxu0 0.0
      %641 = vmatmul.mubr.f32.gmra.mrb[0].mxu0 %v317
      %v642 = vpop.f32.mrb[0].mxu0
      %v643 = vadd.f32 0.0, %v642
      %v644 = vpop.f32.mrb[0].mxu0
      %645 = vmatprep.mubr.f32.mxu0 0.0
      %646 = vmatmul.mubr.f32.gmra.mrb[0].mxu0 %v320
      %v647 = vpop.f32.mrb[0].mxu0
      %v648 = vadd.f32 0.0, %v647
      %v649 = vpop.f32.mrb[0].mxu0
      %650 = vmatprep.mubr.f32.mxu0 0.0
      %651 = vmatmul.mubr.f32.gmra.mrb[0].mxu0 %v323
      %v652 = vpop.f32.mrb[0].mxu0
      %v653 = vadd.f32 0.0, %v652
      %v654 = vpop.f32.mrb[0].mxu0
      %655 = vmatprep.mubr.f32.mxu0 0.0
      %656 = vmatmul.mubr.f32.gmra.mrb[0].mxu0 %v326
      %v657 = vpop.f32.mrb[0].mxu0
      %v658 = vadd.f32 0.0, %v657
      %v659 = vpop.f32.mrb[0].mxu0
      %660 = vmatprep.mubr.f32.mxu0 0.0
      %661 = vmatmul.mubr.f32.gmra.mrb[0].mxu0 %v329
      %v662 = vpop.f32.mrb[0].mxu0
      %v663 = vadd.f32 0.0, %v662
      %v664 = vpop.f32.mrb[0].mxu0
      %665 = vmatprep.mubr.f32.mxu0 0.0
      %666 = vmatmul.mubr.f32.gmra.mrb[0].mxu0 %v332
      %v667 = vpop.f32.mrb[0].mxu0
      %v668 = vadd.f32 0.0, %v667
      %v669 = vpop.f32.mrb[0].mxu0
      %670 = vmatprep.mubr.f32.mxu0 0.0
      %671 = vmatmul.mubr.f32.gmra.mrb[0].mxu0 %v335
      %v672 = vpop.f32.mrb[0].mxu0
      %v673 = vadd.f32 0.0, %v672
      %v674 = vpop.f32.mrb[0].mxu0
      %675 = vmatprep.mubr.f32.mxu0 0.0
      %676 = vmatmul.mubr.f32.gmra.mrb[0].mxu0 %v338
      %v677 = vpop.f32.mrb[0].mxu0
      %v678 = vadd.f32 0.0, %v677
      %v679 = vpop.f32.mrb[0].mxu0
      %680 = vmatprep.mubr.f32.mxu0 0.0
      %681 = vmatmul.mubr.f32.gmra.mrb[0].mxu0 %v341
      %v682 = vpop.f32.mrb[0].mxu0
      %v683 = vadd.f32 0.0, %v682
      %v684 = vpop.f32.mrb[0].mxu0
      %685 = vmatprep.mubr.f32.mxu0 0.0
      %686 = vmatmul.mubr.f32.gmra.mrb[0].mxu0 %v344
      %v687 = vpop.f32.mrb[0].mxu0
      %v688 = vadd.f32 0.0, %v687
      %v689 = vpop.f32.mrb[0].mxu0
      %690 = vmatprep.mubr.f32.mxu0 0.0
      %691 = vmatmul.mubr.f32.gmra.mrb[0].mxu0 %v347
      %v692 = vpop.f32.mrb[0].mxu0
      %v693 = vadd.f32 0.0, %v692
      %v694 = vpop.f32.mrb[0].mxu0
      %695 = vmatprep.mubr.f32.mxu0 0.0
      %696 = vmatmul.mubr.f32.gmra.mrb[0].mxu0 %v350
      %v697 = vpop.f32.mrb[0].mxu0
      %v698 = vadd.f32 0.0, %v697
      %v699 = vpop.f32.mrb[0].mxu0
      %700 = vmatprep.mubr.f32.mxu0 0.0
      %701 = vmatmul.mubr.f32.gmra.mrb[0].mxu0 %v353
      %v702 = vpop.f32.mrb[0].mxu0
      %v703 = vadd.f32 0.0, %v702
      %v704 = vpop.f32.mrb[0].mxu0
      %705 = vmatprep.mubr.f32.mxu0 0.0
      %706 = vmatmul.mubr.f32.gmra.mrb[0].mxu0 %v356
      %v707 = vpop.f32.mrb[0].mxu0
      %v708 = vadd.f32 0.0, %v707
      %v709 = vpop.f32.mrb[0].mxu0
      %710 = vmatprep.mubr.f32.mxu0 0.0
      %711 = vmatmul.mubr.f32.gmra.mrb[0].mxu0 %v359
      %v712 = vpop.f32.mrb[0].mxu0
      %v713 = vadd.f32 0.0, %v712
      %v714 = vpop.f32.mrb[0].mxu0
      %715 = vmatprep.mubr.f32.mxu0 0.0
      %716 = vmatmul.mubr.f32.gmra.mrb[0].mxu0 %v362
      %v717 = vpop.f32.mrb[0].mxu0
      %v718 = vadd.f32 0.0, %v717
      %v719 = vpop.f32.mrb[0].mxu0
      %720 = vmatprep.mubr.f32.mxu0 0.0
      %721 = vmatmul.mubr.f32.gmra.mrb[0].mxu0 %v365
      %v722 = vpop.f32.mrb[0].mxu0
      %v723 = vadd.f32 0.0, %v722
      %v724 = vpop.f32.mrb[0].mxu0
      %725 = vmatprep.mubr.f32.mxu0 0.0
      %726 = vmatmul.mubr.f32.gmra.mrb[0].mxu0 %v368
      %v727 = vpop.f32.mrb[0].mxu0
      %v728 = vadd.f32 0.0, %v727
      %v729 = vpop.f32.mrb[0].mxu0
      %730 = vmatprep.mubr.f32.mxu0 0.0
      %731 = vmatmul.mubr.f32.gmra.mrb[0].mxu0 %v371
      %v732 = vpop.f32.mrb[0].mxu0
      %v733 = vadd.f32 0.0, %v732
      %v734 = vpop.f32.mrb[0].mxu0
      %735 = vmatprep.mubr.f32.mxu0 0.0
      %736 = vmatmul.mubr.f32.gmra.mrb[0].mxu0 %v374
      %v737 = vpop.f32.mrb[0].mxu0
      %v738 = vadd.f32 0.0, %v737
      %v739 = vpop.f32.mrb[0].mxu0
      %740 = vmatprep.mubr.f32.mxu0 0.0
      %741 = vmatmul.mubr.f32.gmra.mrb[0].mxu0 %v377
      %v742 = vpop.f32.mrb[0].mxu0
      %v743 = vadd.f32 0.0, %v742
      %v744 = vpop.f32.mrb[0].mxu0
      %745 = vmatprep.mubr.f32.mxu0 0.0
      %746 = vmatmul.mubr.f32.gmra.mrb[0].mxu0 %v380
      %v747 = vpop.f32.mrb[0].mxu0
      %v748 = vadd.f32 0.0, %v747
      %v749 = vpop.f32.mrb[0].mxu0
      %750 = vmatprep.mubr.f32.mxu0 0.0
      %751 = vmatmul.mubr.f32.gmra.mrb[0].mxu0 %v383
      %v752 = vpop.f32.mrb[0].mxu0
      %v753 = vadd.f32 0.0, %v752
      %v754 = vpop.f32.mrb[0].mxu0
      %755 = vmatprep.mubr.f32.mxu0 0.0
      %756 = vmatmul.mubr.f32.gmra.mrb[0].mxu0 %v386
      %v757 = vpop.f32.mrb[0].mxu0
      %v758 = vadd.f32 0.0, %v757
      %v759 = vpop.f32.mrb[0].mxu0
      %760 = vmatprep.mubr.f32.mxu0 0.0
      %761 = vmatmul.mubr.f32.gmra.mrb[0].mxu0 %v389
      %v762 = vpop.f32.mrb[0].mxu0
      %v763 = vadd.f32 0.0, %v762
      %v764 = vpop.f32.mrb[0].mxu0
      %765 = vmatprep.mubr.f32.mxu0 0.0
      %766 = vmatmul.mubr.f32.gmra.mrb[0].mxu0 %v392
      %v767 = vpop.f32.mrb[0].mxu0
      %v768 = vadd.f32 0.0, %v767
      %v769 = vpop.f32.mrb[0].mxu0
      %770 = vmatprep.mubr.f32.mxu0 0.0
      %771 = vmatmul.mubr.f32.gmra.mrb[0].mxu0 %v395
      %v772 = vpop.f32.mrb[0].mxu0
      %v773 = vadd.f32 0.0, %v772
      %v774 = vpop.f32.mrb[0].mxu0
      %775 = vmatprep.mubr.f32.mxu0 0.0
      %776 = vmatmul.mubr.f32.gmra.mrb[0].mxu0 %v398
      %v777 = vpop.f32.mrb[0].mxu0
      %v778 = vadd.f32 0.0, %v777
      %v779 = vpop.f32.mrb[0].mxu0
      %780 = vmatprep.mubr.f32.mxu0 0.0
      %781 = vmatmul.mubr.f32.gmra.mrb[0].mxu0 %v401
      %v782 = vpop.f32.mrb[0].mxu0
      %v783 = vadd.f32 0.0, %v782
      %v784 = vpop.f32.mrb[0].mxu0
      %785 = vmatprep.mubr.f32.mxu0 0.0
      %786 = vmatmul.mubr.f32.gmra.mrb[0].mxu0 %v404
      %v787 = vpop.f32.mrb[0].mxu0
      %v788 = vadd.f32 0.0, %v787
      %v789 = vpop.f32.mrb[0].mxu0
      %790 = vdwg.mxu0
      %vm791 = vcmask 523264
      %792 = vst.msk [vmem:[%s145] sm:$0xff] %vm791, %v473
      %793 = vst.msk [vmem:[%s145 + $0x8] sm:$0xff] %vm791, %v478
      %794 = vst.msk [vmem:[%s145 + $0x10] sm:$0xff] %vm791, %v483
      %795 = vst.msk [vmem:[%s145 + $0x18] sm:$0xff] %vm791, %v488
      %796 = vst.msk [vmem:[%s145 + $0x20] sm:$0xff] %vm791, %v493
      %797 = vst.msk [vmem:[%s145 + $0x28] sm:$0xff] %vm791, %v498
      %798 = vst.msk [vmem:[%s145 + $0x30] sm:$0xff] %vm791, %v503
      %799 = vst.msk [vmem:[%s145 + $0x38] sm:$0xff] %vm791, %v508
      %800 = vst.msk [vmem:[%s145 + $0x40] sm:$0xff] %vm791, %v513
      %801 = vst.msk [vmem:[%s145 + $0x48] sm:$0xff] %vm791, %v518
      %802 = vst.msk [vmem:[%s145 + $0x50] sm:$0xff] %vm791, %v523
      %803 = vst.msk [vmem:[%s145 + $0x58] sm:$0xff] %vm791, %v528
      %804 = vst.msk [vmem:[%s145 + $0x60] sm:$0xff] %vm791, %v533
      %805 = vst.msk [vmem:[%s145 + $0x68] sm:$0xff] %vm791, %v538
      %806 = vst.msk [vmem:[%s145 + $0x70] sm:$0xff] %vm791, %v543
      %807 = vst.msk [vmem:[%s145 + $0x78] sm:$0xff] %vm791, %v548
      %808 = vst.msk [vmem:[%s145 + $0x80] sm:$0xff] %vm791, %v553
      %809 = vst.msk [vmem:[%s145 + $0x88] sm:$0xff] %vm791, %v558
      %810 = vst.msk [vmem:[%s145 + $0x90] sm:$0xff] %vm791, %v563
      %811 = vst.msk [vmem:[%s145 + $0x98] sm:$0xff] %vm791, %v568
      %812 = vst.msk [vmem:[%s145 + $0xa0] sm:$0xff] %vm791, %v573
      %813 = vst.msk [vmem:[%s145 + $0xa8] sm:$0xff] %vm791, %v578
      %814 = vst.msk [vmem:[%s145 + $0xb0] sm:$0xff] %vm791, %v583
      %815 = vst.msk [vmem:[%s145 + $0xb8] sm:$0xff] %vm791, %v588
      %816 = vst.msk [vmem:[%s145 + $0xc0] sm:$0xff] %vm791, %v593
      %817 = vst.msk [vmem:[%s145 + $0xc8] sm:$0xff] %vm791, %v598
      %818 = vst.msk [vmem:[%s145 + $0xd0] sm:$0xff] %vm791, %v603
      %819 = vst.msk [vmem:[%s145 + $0xd8] sm:$0xff] %vm791, %v608
      %820 = vst.msk [vmem:[%s145 + $0xe0] sm:$0xff] %vm791, %v613
      %821 = vst.msk [vmem:[%s145 + $0xe8] sm:$0xff] %vm791, %v618
      %822 = vst.msk [vmem:[%s145 + $0xf0] sm:$0xff] %vm791, %v623
      %823 = vst.msk [vmem:[%s145 + $0xf8] sm:$0xff] %vm791, %v628
      %824 = vst.msk [vmem:[%s145 + $0x100] sm:$0xff] %vm791, %v633
      %825 = vst.msk [vmem:[%s145 + $0x108] sm:$0xff] %vm791, %v638
      %826 = vst.msk [vmem:[%s145 + $0x110] sm:$0xff] %vm791, %v643
      %827 = vst.msk [vmem:[%s145 + $0x118] sm:$0xff] %vm791, %v648
      %828 = vst.msk [vmem:[%s145 + $0x120] sm:$0xff] %vm791, %v653
      %829 = vst.msk [vmem:[%s145 + $0x128] sm:$0xff] %vm791, %v658
      %830 = vst.msk [vmem:[%s145 + $0x130] sm:$0xff] %vm791, %v663
      %831 = vst.msk [vmem:[%s145 + $0x138] sm:$0xff] %vm791, %v668
      %832 = vst.msk [vmem:[%s145 + $0x140] sm:$0xff] %vm791, %v673
      %833 = vst.msk [vmem:[%s145 + $0x148] sm:$0xff] %vm791, %v678
      %834 = vst.msk [vmem:[%s145 + $0x150] sm:$0xff] %vm791, %v683
      %835 = vst.msk [vmem:[%s145 + $0x158] sm:$0xff] %vm791, %v688
      %836 = vst.msk [vmem:[%s145 + $0x160] sm:$0xff] %vm791, %v693
      %837 = vst.msk [vmem:[%s145 + $0x168] sm:$0xff] %vm791, %v698
      %838 = vst.msk [vmem:[%s145 + $0x170] sm:$0xff] %vm791, %v703
      %839 = vst.msk [vmem:[%s145 + $0x178] sm:$0xff] %vm791, %v708
      %840 = vst.msk [vmem:[%s145 + $0x180] sm:$0xff] %vm791, %v713
      %841 = vst.msk [vmem:[%s145 + $0x188] sm:$0xff] %vm791, %v718
      %842 = vst.msk [vmem:[%s145 + $0x190] sm:$0xff] %vm791, %v723
      %843 = vst.msk [vmem:[%s145 + $0x198] sm:$0xff] %vm791, %v728
      %844 = vst.msk [vmem:[%s145 + $0x1a0] sm:$0xff] %vm791, %v733
      %845 = vst.msk [vmem:[%s145 + $0x1a8] sm:$0xff] %vm791, %v738
      %846 = vst.msk [vmem:[%s145 + $0x1b0] sm:$0xff] %vm791, %v743
      %847 = vst.msk [vmem:[%s145 + $0x1b8] sm:$0xff] %vm791, %v748
      %848 = vst.msk [vmem:[%s145 + $0x1c0] sm:$0xff] %vm791, %v753
      %849 = vst.msk [vmem:[%s145 + $0x1c8] sm:$0xff] %vm791, %v758
      %850 = vst.msk [vmem:[%s145 + $0x1d0] sm:$0xff] %vm791, %v763
      %851 = vst.msk [vmem:[%s145 + $0x1d8] sm:$0xff] %vm791, %v768
      %852 = vst.msk [vmem:[%s145 + $0x1e0] sm:$0xff] %vm791, %v773
      %853 = vst.msk [vmem:[%s145 + $0x1e8] sm:$0xff] %vm791, %v778
      %854 = vst.msk [vmem:[%s145 + $0x1f0] sm:$0xff] %vm791, %v783
      %855 = vst.msk [vmem:[%s145 + $0x1f8] sm:$0xff] %vm791, %v788
      %s856 = smul.u32 64, %s13
      %p857 = scmp.lt.s32.totalorder %s856, 127
      %s858 = scalar_select %p857, %s856, 127
      %s859 = smul.addr %s858, 8
      %s860 = scalar_lea.vmem %s2, %s859
      // Predicated region
      $region29: #{tpu_custom_call.1} parent=27 // pred_check
        %p861 = pneg %p78
      $region30: #{tpu_custom_call.1} parent=27 // pred_check_branch
        %863 = sbr.rel (%p861) target = $region32
      $region31: #{tpu_custom_call.1} parent=27 // pred_region
        %s864 = smul.u32 64, %s13
      $region32: #{tpu_custom_call.1} parent=27 // pred_fallthru
        _
    $region28: #{tpu_custom_call.1} parent=5 // pred_fallthru
      _
    %p865 = scmp.le.s32.totalorder 2, %s8
    // Predicated region
    $region33: #{tpu_custom_call.1} parent=5 // pred_check
      %p866 = pneg %p865
    $region34: #{tpu_custom_call.1} parent=5 // pred_check_branch
      %868 = sbr.rel (%p866) target = $region36
    $region35: #{tpu_custom_call.1} parent=5 // pred_region
      %s869 = ssub.s32 %s8, 2
      // Predicated region
      $region37: #{tpu_custom_call.1} parent=35 // pred_check
        %p870 = pneg %p84
      $region38: #{tpu_custom_call.1} parent=35 // pred_check_branch
        %872 = sbr.rel (%p870) target = $region40
      $region39: #{tpu_custom_call.1} parent=35 // pred_region
        %s873 = smul.u32 64, %s14
        %p874 = scmp.lt.s32.totalorder %s873, 127
        %s875 = scalar_select %p874, %s873, 127
        %s876 = smul.addr %s875, 8
        %s877 = scalar_lea.vmem %s2, %s876
      $region40: #{tpu_custom_call.1} parent=35 // pred_fallthru
        _
    $region36: #{tpu_custom_call.1} parent=5 // pred_fallthru
      _
  $region6: #{tpu_custom_call.1} parent=0 // loop_footer
    %s12 = sadd.s32 1, %s8
  $region7: #{tpu_custom_call.1} parent=0 // loop_footer_branch
    %7 = sbr.rel target = $region3
  $region8: #{tpu_custom_call.1} parent=0 // loop_exit
    _

</llo_original>
